<compile_context>
chip_gen: v6e
topology: v6e:2x2x1
jax: 0.10.0
libtpu: 0.0.40
codegen_flags: <defaults>
</compile_context>

<pallas_src>
import jax
import jax.numpy as jnp
from jax.experimental import pallas as pl
from jax.experimental.pallas import tpu as pltpu


# ----------------------------- helpers ---------------------------------------


def _round_up(x, m):
    return (x + m - 1) // m * m


def _pick_tile(n, cap):
    """Largest divisor of n that is a multiple of 8 and <= cap; fallback: full n."""
    best = 0
    for d in range(8, min(n, cap) + 1, 8):
        if n % d == 0:
            best = d
    return best if best > 0 else n


def _vmem_limit(*nbytes):
    """Explicit VMEM budget with headroom, clamped to be safe on v5e/v6e/v7x."""
    est = int(sum(nbytes)) + (8 << 20)
    return max(32 << 20, min(est, 64 << 20))


# ----------------------------- kernels ----------------------------------------


def _pass1_kernel(x_ref, w1_ref, h_ref, stats_ref):
    # h = x @ W1 (MXU, optionally bf16 operands, f32 accumulation).
    # b1 is intentionally omitted: train-mode BatchNorm subtracts the batch mean of
    # (x@W1 + b1), so b1 cancels exactly.
    h = jnp.dot(x_ref[...].astype(w1_ref.dtype), w1_ref[...],
                preferred_element_type=jnp.float32)
    h_ref[...] = h
    # One-pass BN statistics: per-tile partial sum / sum-of-squares (combined in JAX
    # glue). Keeping these as per-tile outputs (instead of a resident accumulator)
    # lets the grid axis stay "parallel" for the v7x dual-TensorCore case.
    stats_ref[0, 0:1, :] = jnp.sum(h, axis=0, keepdims=True)
    stats_ref[0, 1:2, :] = jnp.sum(h * h, axis=0, keepdims=True)


def _pass2_kernel(h_ref, vec_ref, w2_ref, y_ref, pool_ref):
    h = h_ref[0]                                   # (tl, Cp) f32
    bn_scale = vec_ref[0:1, :]                     # gamma * rsqrt(var + eps)  (folded)
    bn_shift = vec_ref[1:2, :]                     # beta - mean * bn_scale
    b2 = vec_ref[2:3, :]
    hn = h * bn_scale + bn_shift                   # BatchNorm (train-mode batch stats)
    sw = hn * jax.nn.sigmoid(hn)                   # Swish
    y = jnp.dot(sw.astype(w2_ref.dtype), w2_ref[...],
                preferred_element_type=jnp.float32) + b2
    y_ref[0] = y
    # Per-batch SE pool partial: plain cross-sublane reduce (no pool-matrix matmul).
    pool_ref[0, 0] = jnp.sum(y, axis=0, keepdims=True)


def _pass3_kernel(x_ref, y_ref, se_ref, o_ref):
    # residual: x + 0.1 * (y * se_scale), broadcast of the per-batch (1, Cp) scale.
    o_ref[0] = x_ref[0] + 0.1 * (y_ref[0] * se_ref[0])


# ----------------------------- wrapper ----------------------------------------


def residual_linear_block(x_ncl, params, *, eps=1e-5, mxu_dtype=jnp.float32,
                          row_tile_target=512):
    """x_ncl: (B, dim, dim_nums) float32, same layout as the PyTorch module input."""
    B, C, L = x_ncl.shape
    N = B * L
    f32 = jnp.float32
    hp = jax.lax.Precision.HIGHEST

    # Lane-dense channel padding (last dim a multiple of 128). Zero padding is exact:
    # padded channels stay identically zero through Linear/BN/Swish/Linear/SE.
    Cp = _round_up(max(C, 128), 128)
    pad_c = Cp - C

    x_rows = jnp.transpose(x_ncl, (0, 2, 1)).reshape(N, C).astype(f32)
    xp = jnp.pad(x_rows, ((0, 0), (0, pad_c)))

    pad_mat = lambda w: jnp.pad(w, ((0, pad_c), (0, pad_c)))
    pad_vec = lambda v: jnp.pad(v.reshape(-1).astype(f32), (0, pad_c))

    w1 = pad_mat(params["w1"]).astype(mxu_dtype)   # bf16 on v6e/v7x halves HBM/VMEM
    w2 = pad_mat(params["w2"]).astype(mxu_dtype)
    gamma = pad_vec(params["gamma"])
    beta = pad_vec(params["beta"])
    b2 = pad_vec(params["b2"])
    # params["b1"] is deliberately unused (cancelled by train-mode BN mean).

    # Tile sizing: multiples of 8, capped so double-buffered tiles stay well within a
    # v7x-safe VMEM budget (re-derived per channel width).
    row_cap = max(8, min(row_tile_target, (4 << 20) // (Cp * 4)))
    tn = _pick_tile(N, row_cap)        # rows per tile, pass 1
    tl = _pick_tile(L, row_cap)        # positions per tile, passes 2/3
    T1 = N // tn
    T2 = L // tl
    wbytes = Cp * Cp * jnp.dtype(mxu_dtype).itemsize
    # TODO(synk): single-buffer the resident W1/W2 blocks (pl.Buffered(1)) when VMEM
    # is tight on v7x; kept default-buffered here for portability.

    # ---- pass 1: x @ W1 + per-tile BN partial stats (row axis fully parallel) ----
    h, stats = pl.pallas_call(
        _pass1_kernel,
        out_shape=(jax.ShapeDtypeStruct((N, Cp), f32),
                   jax.ShapeDtypeStruct((T1, 2, Cp), f32)),
        grid=(T1,),
        in_specs=[
            pl.BlockSpec((tn, Cp), lambda i: (i, 0)),
            pl.BlockSpec((Cp, Cp), lambda i: (0, 0)),
        ],
        out_specs=(
            pl.BlockSpec((tn, Cp), lambda i: (i, 0)),
            pl.BlockSpec((1, 2, Cp), lambda i: (i, 0, 0)),
        ),
        compiler_params=pltpu.CompilerParams(
            dimension_semantics=("parallel",),
            vmem_limit_bytes=_vmem_limit(4 * tn * Cp * 4, 2 * wbytes)),
    )(xp, w1)

    # ---- tiny glue: combine partials, fold BN into one scale/shift vector pair ----
    ssum = jnp.sum(stats[:, 0, :], axis=0)
    ssq = jnp.sum(stats[:, 1, :], axis=0)
    mean = ssum / N
    var = jnp.maximum(ssq / N - mean * mean, 0.0)   # one-pass (biased) variance
    inv = jax.lax.rsqrt(var + eps)
    bn_scale = gamma * inv
    bn_shift = beta - mean * bn_scale
    vecs = jnp.stack([bn_scale, bn_shift, b2], axis=0)          # packed (3, Cp)

    # ---- pass 2: BN -> Swish -> @W2 + per-(batch, tile) SE pool partials ----------
    h3 = h.reshape(B, L, Cp)
    y, pool = pl.pallas_call(
        _pass2_kernel,
        out_shape=(jax.ShapeDtypeStruct((B, L, Cp), f32),
                   jax.ShapeDtypeStruct((B, T2, 1, Cp), f32)),
        grid=(B, T2),
        in_specs=[
            pl.BlockSpec((1, tl, Cp), lambda b, t: (b, t, 0)),
            pl.BlockSpec((3, Cp), lambda b, t: (0, 0)),
            pl.BlockSpec((Cp, Cp), lambda b, t: (0, 0)),
        ],
        out_specs=(
            pl.BlockSpec((1, tl, Cp), lambda b, t: (b, t, 0)),
            pl.BlockSpec((1, 1, 1, Cp), lambda b, t: (b, t, 0, 0)),
        ),
        compiler_params=pltpu.CompilerParams(
            dimension_semantics=("parallel", "parallel"),
            vmem_limit_bytes=_vmem_limit(4 * tl * Cp * 4, 2 * wbytes)),
    )(h3, vecs, w2)

    # ---- tiny glue: SE bottleneck MLP on the (B, C) pooled vector -----------------
    s = jnp.sum(pool[:, :, 0, :], axis=1) / L                    # (B, Cp) mean over L
    s = s[:, :C]
    z = jnp.maximum(jnp.dot(s, params["wfc1"], precision=hp), 0.0)
    se = jax.nn.sigmoid(jnp.dot(z, params["wfc2"], precision=hp))
    se = jnp.pad(se, ((0, 0), (0, pad_c))).reshape(B, 1, Cp).astype(f32)

    # ---- pass 3: residual + SE scaling (purely parallel) --------------------------
    x3 = xp.reshape(B, L, Cp)
    out3 = pl.pallas_call(
        _pass3_kernel,
        out_shape=jax.ShapeDtypeStruct((B, L, Cp), f32),
        grid=(B, T2),
        in_specs=[
            pl.BlockSpec((1, tl, Cp), lambda b, t: (b, t, 0)),
            pl.BlockSpec((1, tl, Cp), lambda b, t: (b, t, 0)),
            pl.BlockSpec((1, 1, Cp), lambda b, t: (b, 0, 0)),
        ],
        out_specs=pl.BlockSpec((1, tl, Cp), lambda b, t: (b, t, 0)),
        compiler_params=pltpu.CompilerParams(
            dimension_semantics=("parallel", "parallel"),
            vmem_limit_bytes=_vmem_limit(8 * tl * Cp * 4)),
    )(x3, y, se)

    out = out3[:, :, :C]                                          # drop channel pad
    return jnp.transpose(out, (0, 2, 1)).astype(x_ncl.dtype)      # back to (B, C, L)


# ----------------------------- init & reference --------------------------------


def init_params(key, dim, reduction=4):
    """nn.Linear default init (uniform +-1/sqrt(fan_in)); weights stored (in, out)."""
    num_hidden = max(dim // reduction, 4)
    k1, k2, k3, k4, k5, k6 = jax.random.split(key, 6)

    def uni(k, shape, fan_in):
        bound = 1.0 / (fan_in ** 0.5)
        return jax.random.uniform(k, shape, jnp.float32, -bound, bound)

    return {
        "w1": uni(k1, (dim, dim), dim),
        "b1": uni(k2, (dim,), dim),          # kept for parity with PyTorch; cancels in BN
        "gamma": jnp.ones((dim,), jnp.float32),
        "beta": jnp.zeros((dim,), jnp.float32),
        "w2": uni(k3, (dim, dim), dim),
        "b2": uni(k4, (dim,), dim),
        "wfc1": uni(k5, (dim, num_hidden), dim),        # SE fc1, bias=False
        "wfc2": uni(k6, (num_hidden, dim), num_hidden),  # SE fc2, bias=False
    }


def reference(x_ncl, params, eps=1e-5):
    """Pure-JAX reference of the PyTorch forward (training-mode BatchNorm)."""
    B, C, L = x_ncl.shape
    hp = jax.lax.Precision.HIGHEST
    xr = jnp.transpose(x_ncl, (0, 2, 1)).reshape(B * L, C)
    h = jnp.dot(xr, params["w1"], precision=hp) + params["b1"]
    mean = jnp.mean(h, axis=0, keepdims=True)
    var = jnp.mean(jnp.square(h - mean), axis=0, keepdims=True)
    hn = (h - mean) / jnp.sqrt(var + eps) * params["gamma"] + params["beta"]
    sw = hn * jax.nn.sigmoid(hn)
    y = jnp.dot(sw, params["w2"], precision=hp) + params["b2"]
    yb = y.reshape(B, L, C)
    s = jnp.mean(yb, axis=1)
    z = jnp.maximum(jnp.dot(s, params["wfc1"], precision=hp), 0.0)
    scale = jax.nn.sigmoid(jnp.dot(z, params["wfc2"], precision=hp))
    out_rows = xr.reshape(B, L, C) + 0.1 * (yb * scale[:, None, :])
    return jnp.transpose(out_rows, (0, 2, 1))


if __name__ == "__main__":
    B, dim, dim_nums = 2, 32, 8              # dim == linear_dim (required by module)
    key = jax.random.PRNGKey(0)
    kx, kp = jax.random.split(key)

    x = jax.random.normal(kx, (B, dim, dim_nums), jnp.float32)
    params = init_params(kp, dim)

    ref = reference(x, params)

    # f32 MXU path: tight check against the PyTorch-equivalent reference.
    out = jax.block_until_ready(residual_linear_block(x, params))
    assert out.shape == (B, dim, dim_nums)
    assert jnp.allclose(out, ref, atol=1e-4, rtol=1e-4), "f32 kernel mismatch"

    # bf16 MXU path (v6e/v7x optimization): looser, bf16-aware tolerance.
    out_bf16 = jax.block_until_ready(
        residual_linear_block(x, params, mxu_dtype=jnp.bfloat16))
    assert jnp.allclose(out_bf16, ref, atol=2e-2, rtol=2e-2), "bf16 kernel mismatch"

    print("KERNEL_OK")
</pallas_src>

<mosaic_0001>
module attributes {stable_mosaic.version = 11 : i64} {
  func.func @_pass1_kernel(%arg0: i32, %arg1: memref<16x128xf32, #tpu.memory_space<vmem>>, %arg2: memref<128x128xf32, #tpu.memory_space<vmem>>, %arg3: memref<16x128xf32, #tpu.memory_space<vmem>>, %arg4: memref<1x2x128xf32, #tpu.memory_space<vmem>>) attributes {dimension_semantics = [#tpu.dimension_semantics<parallel>], iteration_bounds = array<i64: 1>, scalar_prefetch = 0 : i64, scratch_operands = 0 : i64, tpu.core_type = #tpu.core_type<tc>, window_params = [{transform_indices = @transform_0, window_bounds = array<i64: 16, 128>}, {pipeline_mode = #tpu.pipeline_mode<synchronous>, transform_indices = @transform_1, window_bounds = array<i64: 128, 128>}, {transform_indices = @transform_2, window_bounds = array<i64: 16, 128>}, {transform_indices = @transform_3, window_bounds = array<i64: 1, 2, 128>}]} {
    %c0 = arith.constant 0 : index
    %c0_0 = arith.constant 0 : index
    %0 = vector.load %arg1[%c0, %c0_0] : memref<16x128xf32, #tpu.memory_space<vmem>>, vector<16x128xf32>
    %c0_1 = arith.constant 0 : index
    %c0_2 = arith.constant 0 : index
    %1 = vector.load %arg2[%c0_1, %c0_2] : memref<128x128xf32, #tpu.memory_space<vmem>>, vector<128x128xf32>
    %cst = arith.constant dense<0.000000e+00> : vector<16x128xf32>
    %2 = tpu.matmul %0, %1, %cst {dimension_numbers = #tpu.dot_dimension_numbers<[1], [0], [0], [1], [0, 0, 1, 1], [], []>} : vector<16x128xf32>, vector<128x128xf32>, vector<16x128xf32> -> vector<16x128xf32>
    %c0_3 = arith.constant 0 : index
    %c0_4 = arith.constant 0 : index
    %3 = vector.load %arg3[%c0_3, %c0_4] : memref<16x128xf32, #tpu.memory_space<vmem>>, vector<16x128xf32>
    tpu.vector_store %arg3[%c0_3, %c0_4], %2 {strides = array<i32>} : memref<16x128xf32, #tpu.memory_space<vmem>>, vector<16x128xf32>,
    %cst_5 = arith.constant dense<0.000000e+00> : vector<128xf32>
    %4 = vector.multi_reduction <add>, %2, %cst_5 [0] : vector<16x128xf32> to vector<128xf32>
    %5 = vector.shape_cast %4 : vector<128xf32> to vector<1x128xf32>
    %c0_6 = arith.constant 0 : index
    %c0_7 = arith.constant 0 : index
    %c0_8 = arith.constant 0 : index
    %6 = vector.load %arg4[%c0_6, %c0_7, %c0_8] : memref<1x2x128xf32, #tpu.memory_space<vmem>>, vector<1x1x128xf32>
    %7 = vector.shape_cast %6 : vector<1x1x128xf32> to vector<1x128xf32>
    %8 = vector.shape_cast %5 : vector<1x128xf32> to vector<1x1x128xf32>
    tpu.vector_store %arg4[%c0_6, %c0_7, %c0_8], %8 {strides = array<i32>} : memref<1x2x128xf32, #tpu.memory_space<vmem>>, vector<1x1x128xf32>,
    %9 = arith.mulf %2, %2 : vector<16x128xf32>
    %cst_9 = arith.constant dense<0.000000e+00> : vector<128xf32>
    %10 = vector.multi_reduction <add>, %9, %cst_9 [0] : vector<16x128xf32> to vector<128xf32>
    %11 = vector.shape_cast %10 : vector<128xf32> to vector<1x128xf32>
    %c0_10 = arith.constant 0 : index
    %c1 = arith.constant 1 : index
    %c0_11 = arith.constant 0 : index
    %12 = vector.load %arg4[%c0_10, %c1, %c0_11] : memref<1x2x128xf32, #tpu.memory_space<vmem>>, vector<1x1x128xf32>
    %13 = vector.shape_cast %12 : vector<1x1x128xf32> to vector<1x128xf32>
    %14 = vector.shape_cast %11 : vector<1x128xf32> to vector<1x1x128xf32>
    tpu.vector_store %arg4[%c0_10, %c1, %c0_11], %14 {strides = array<i32>} : memref<1x2x128xf32, #tpu.memory_space<vmem>>, vector<1x1x128xf32>,
    return
  }
  func.func @transform_0(%arg0: i32) -> (i32, i32) {
    %c0_i32 = arith.constant 0 : i32
    %c0_i32_0 = arith.constant 0 : i32
    return %arg0, %c0_i32 : i32, i32
  }
  func.func @transform_1(%arg0: i32) -> (i32, i32) {
    %c0_i32 = arith.constant 0 : i32
    %c0_i32_0 = arith.constant 0 : i32
    %c0_i32_1 = arith.constant 0 : i32
    return %c0_i32, %c0_i32_0 : i32, i32
  }
  func.func @transform_2(%arg0: i32) -> (i32, i32) {
    %c0_i32 = arith.constant 0 : i32
    %c0_i32_0 = arith.constant 0 : i32
    return %arg0, %c0_i32 : i32, i32
  }
  func.func @transform_3(%arg0: i32) -> (i32, i32, i32) {
    %c0_i32 = arith.constant 0 : i32
    %c0_i32_0 = arith.constant 0 : i32
    %c0_i32_1 = arith.constant 0 : i32
    return %arg0, %c0_i32, %c0_i32_0 : i32, i32, i32
  }
}

</mosaic_0001>

<llo_original>
// kernel: tpu_custom_call.1
$region0: #{tpu_custom_call.1}
  #allocation0 [shape = 'u32[]', space=smem, size = 0x4, offset = 0x4, fixed_abs, tag = 'smem constant byte address 0x4 - core index']
  #allocation1 [shape = 'u32[144,128]{1,0:T(1,128)}', space=vmem, size = 0x12000, scoped, tag = 'internal scratch']
  %s0 = inlined_call_operand.hbm [shape: f32[16,128], index: 0, kind: input, shape index: {}]
  %s1 = inlined_call_operand.hbm [shape: f32[128,128], index: 1, kind: input, shape index: {}]
  %s2 = inlined_call_operand.hbm [shape: f32[16,128], index: 2, kind: output, shape index: {0}]
  %s3 = inlined_call_operand.hbm [shape: f32[1,2,128], index: 3, kind: output, shape index: {1}]
  %4 = xla_tuple %s2, %s3
  %s5 = sld [smem:[#allocation0]]
  $region34: #{tpu_custom_call.1} parent=0
    _
  %s7 = ssub.s32 1, %s5
  %s8 = scalar_select 0, %s7, %s5
  $region1: #{tpu_custom_call.1} parent=0
    #allocation2 [shape = 'u8[8192]{0}', space=vmem, size = 0x2000, scoped, tag = 'input window, operand 0, single buffered']
    #allocation3 [shape = 's32[1]{0}', space=sflag, size = 0x4, scoped, tag = 'scoped memory for tpu_custom_call.1']
    #allocation4 [shape = 's32[1]{0}', space=sflag, size = 0x4, scoped, tag = 'scoped memory for tpu_custom_call.1']
    #allocation5 [shape = 'u8[65536]{0}', space=vmem, size = 0x10000, scoped, tag = 'input window, operand 1, single buffered']
    #allocation6 [shape = 's32[1]{0}', space=sflag, size = 0x4, scoped, tag = 'scoped memory for tpu_custom_call.1']
    #allocation7 [shape = 'u8[8192]{0}', space=vmem, size = 0x2000, scoped, tag = 'output window, operand 0, single buffered']
    #allocation8 [shape = 'u8[1024]{0}', space=vmem, size = 0x400, scoped, tag = 'output window, operand 1, single buffered']
    #allocation9 [shape = 's32[1]{0}', space=sflag, size = 0x4, scoped, tag = 'scoped memory for tpu_custom_call.1']
    %9 = vsyncpa [#allocation3], 0
    %10 = vsyncpa [#allocation6], 0
    %11 = vsyncpa [#allocation4], 0
    %12 = vsyncpa [#allocation9], 0
    // Predicated region
    $region2: #{tpu_custom_call.1} parent=1 // pred_check
      _
    $region3: #{tpu_custom_call.1} parent=1 // pred_check_branch
      %14 = sbr.rel (0) target = $region5
    $region4: #{tpu_custom_call.1} parent=1 // pred_region
      %s16 = ssub.s32 256, 256
      %17 = vsyncadd [#allocation3], %s16
      %s18 = sshll.u32 [#allocation2], 4
      %s19 = int_to_ptr.vmem [resolvable:$true] %s18
      %24 = dma.hbm_to_vmem [thread:$0]  %s0, 256, %s19, [#allocation3], 128, 128, 8
    $region5: #{tpu_custom_call.1} parent=1 // pred_fallthru
      _
    // Predicated region
    $region6: #{tpu_custom_call.1} parent=1 // pred_check
      _
    $region7: #{tpu_custom_call.1} parent=1 // pred_check_branch
      %26 = sbr.rel (0) target = $region9
    $region8: #{tpu_custom_call.1} parent=1 // pred_region
      %s28 = ssub.s32 2048, 2048
      %29 = vsyncadd [#allocation6], %s28
      %s30 = sshll.u32 [#allocation5], 4
      %s31 = int_to_ptr.vmem [resolvable:$true] %s30
      %36 = dma.hbm_to_vmem [thread:$0]  %s1, 2048, %s31, [#allocation6], 128, 128, 8
    $region9: #{tpu_custom_call.1} parent=1 // pred_fallthru
      _
    // Predicated region
    $region10: #{tpu_custom_call.1} parent=1 // pred_check
      _
    $region11: #{tpu_custom_call.1} parent=1 // pred_check_branch
      %38 = sbr.rel (0) target = $region13
    $region12: #{tpu_custom_call.1} parent=1 // pred_region
      %39 = dma.done [#allocation3], 256
    $region13: #{tpu_custom_call.1} parent=1 // pred_fallthru
      _
    // Predicated region
    $region14: #{tpu_custom_call.1} parent=1 // pred_check
      _
    $region15: #{tpu_custom_call.1} parent=1 // pred_check_branch
      %41 = sbr.rel (0) target = $region17
    $region16: #{tpu_custom_call.1} parent=1 // pred_region
      %42 = dma.done [#allocation6], 2048
    $region17: #{tpu_custom_call.1} parent=1 // pred_fallthru
      _
    %v43 = vld [vmem:[#allocation2] sm:$0xff]
    %v44 = vld [vmem:[#allocation2 + $0x8] sm:$0xff]
    %v45 = vld [vmem:[#allocation5] sm:$0xff]
    %v46 = vld [vmem:[#allocation5 + $0x8] sm:$0xff]
    %v47 = vld [vmem:[#allocation5 + $0x10] sm:$0xff]
    %v48 = vld [vmem:[#allocation5 + $0x18] sm:$0xff]
    %v49 = vld [vmem:[#allocation5 + $0x20] sm:$0xff]
    %v50 = vld [vmem:[#allocation5 + $0x28] sm:$0xff]
    %v51 = vld [vmem:[#allocation5 + $0x30] sm:$0xff]
    %v52 = vld [vmem:[#allocation5 + $0x38] sm:$0xff]
    %v53 = vld [vmem:[#allocation5 + $0x40] sm:$0xff]
    %v54 = vld [vmem:[#allocation5 + $0x48] sm:$0xff]
    %v55 = vld [vmem:[#allocation5 + $0x50] sm:$0xff]
    %v56 = vld [vmem:[#allocation5 + $0x58] sm:$0xff]
    %v57 = vld [vmem:[#allocation5 + $0x60] sm:$0xff]
    %v58 = vld [vmem:[#allocation5 + $0x68] sm:$0xff]
    %v59 = vld [vmem:[#allocation5 + $0x70] sm:$0xff]
    %v60 = vld [vmem:[#allocation5 + $0x78] sm:$0xff]
    %61 = vmatprep.subr.mxu0 0.0
    %62 = vmatpush1.msra.mxu0 %v60
    %63 = vmatprep.subr.mxu0 0.0
    %64 = vmatpush1.msra.mxu0 %v59
    %65 = vmatprep.subr.mxu0 0.0
    %66 = vmatpush1.msra.mxu0 %v58
    %67 = vmatprep.subr.mxu0 0.0
    %68 = vmatpush1.msra.mxu0 %v57
    %69 = vmatprep.subr.mxu0 0.0
    %70 = vmatpush1.msra.mxu0 %v56
    %71 = vmatprep.subr.mxu0 0.0
    %72 = vmatpush1.msra.mxu0 %v55
    %73 = vmatprep.subr.mxu0 0.0
    %74 = vmatpush1.msra.mxu0 %v54
    %75 = vmatprep.subr.mxu0 0.0
    %76 = vmatpush1.msra.mxu0 %v53
    %77 = vmatprep.subr.mxu0 0.0
    %78 = vmatpush1.msra.mxu0 %v52
    %79 = vmatprep.subr.mxu0 0.0
    %80 = vmatpush1.msra.mxu0 %v51
    %81 = vmatprep.subr.mxu0 0.0
    %82 = vmatpush1.msra.mxu0 %v50
    %83 = vmatprep.subr.mxu0 0.0
    %84 = vmatpush1.msra.mxu0 %v49
    %85 = vmatprep.subr.mxu0 0.0
    %86 = vmatpush1.msra.mxu0 %v48
    %87 = vmatprep.subr.mxu0 0.0
    %88 = vmatpush1.msra.mxu0 %v47
    %89 = vmatprep.subr.mxu0 0.0
    %90 = vmatpush1.msra.mxu0 %v46
    %91 = vmatprep.subr.mxu0 0.0
    %92 = vmatpush1.msra.mxu0 %v45
    %93 = vmatprep.subr.mxu0 0.0
    %94 = vmatpush2.msra.mxu0 0.0
    %95 = vmatprep.subr.mxu0 0.0
    %96 = vmatpush2.msra.mxu0 0.0
    %97 = vmatprep.subr.mxu0 0.0
    %98 = vmatpush2.msra.mxu0 0.0
    %99 = vmatprep.subr.mxu0 0.0
    %100 = vmatpush2.msra.mxu0 0.0
    %101 = vmatprep.subr.mxu0 0.0
    %102 = vmatpush2.msra.mxu0 0.0
    %103 = vmatprep.subr.mxu0 0.0
    %104 = vmatpush2.msra.mxu0 0.0
    %105 = vmatprep.subr.mxu0 0.0
    %106 = vmatpush2.msra.mxu0 0.0
    %107 = vmatprep.subr.mxu0 0.0
    %108 = vmatpush2.msra.mxu0 0.0
    %109 = vmatprep.subr.mxu0 0.0
    %110 = vmatpush2.msra.mxu0 0.0
    %111 = vmatprep.subr.mxu0 0.0
    %112 = vmatpush2.msra.mxu0 0.0
    %113 = vmatprep.subr.mxu0 0.0
    %114 = vmatpush2.msra.mxu0 0.0
    %115 = vmatprep.subr.mxu0 0.0
    %116 = vmatpush2.msra.mxu0 0.0
    %117 = vmatprep.subr.mxu0 0.0
    %118 = vmatpush2.msra.mxu0 0.0
    %119 = vmatprep.subr.mxu0 0.0
    %120 = vmatpush2.msra.mxu0 0.0
    %121 = vmatprep.subr.mxu0 0.0
    %122 = vmatpush2.msra.mxu0 0.0
    %123 = vmatprep.subr.mxu0 0.0
    %124 = vmatpush2.msra.mxu0 0.0
    %125 = vmatprep.mubr.f32.mxu0 0.0
    %126 = vmatmul.mubr.f32.gmra.mxu0 %v43
    %v127 = vpop.f32.mrf.mxu0
    %v128 = vadd.f32 0.0, %v127
    %v129 = vpop.f32.mrf.mxu0
    %130 = vmatprep.mubr.f32.mxu0 0.0
    %131 = vmatmul.mubr.f32.gmra.mxu0 %v44
    %v132 = vpop.f32.mrf.mxu0
    %v133 = vadd.f32 0.0, %v132
    %v134 = vpop.f32.mrf.mxu0
    %135 = vdwg.mxu0
    %136 = vst [vmem:[#allocation7] sm:$0xff] %v128
    %137 = vst [vmem:[#allocation7 + $0x8] sm:$0xff] %v133
    %v138 = vadd.f32 %v128, %v133
    %v139 = vrot.slane %v138, 4
    %v140 = vadd.f32 %v138, %v139
    %v141 = vrot.slane %v140, 2
    %v142 = vadd.f32 %v140, %v141
    %v143 = vrot.slane %v142, 1
    %v144 = vadd.f32 %v142, %v143
    %145 = vst [vmem:[#allocation8] sm:$0x1] %v144
    %v146 = vmul.f32 %v128, %v128
    %v147 = vmul.f32 %v133, %v133
    %v148 = vadd.f32 %v146, %v147
    %v149 = vrot.slane %v148, 4
    %v150 = vadd.f32 %v148, %v149
    %v151 = vrot.slane %v150, 2
    %v152 = vadd.f32 %v150, %v151
    %v153 = vrot.slane %v152, 1
    %v154 = vadd.f32 %v152, %v153
    %155 = vst [vmem:[#allocation8 + $0x1] sm:$0x1] %v154
    // Predicated region
    $region18: #{tpu_custom_call.1} parent=1 // pred_check
      _
    $region19: #{tpu_custom_call.1} parent=1 // pred_check_branch
      %157 = sbr.rel (0) target = $region21
    $region20: #{tpu_custom_call.1} parent=1 // pred_region
      %s159 = ssub.s32 256, 256
      %160 = vsyncadd [#allocation4], %s159
      %s161 = sshll.u32 [#allocation7], 4
      %s162 = int_to_ptr.vmem [resolvable:$true] %s161
      %167 = dma.vmem_to_hbm [thread:$0]  %s162, 256, %s2, [#allocation4], 128, 128, 8
    $region21: #{tpu_custom_call.1} parent=1 // pred_fallthru
      _
    // Predicated region
    $region22: #{tpu_custom_call.1} parent=1 // pred_check
      _
    $region23: #{tpu_custom_call.1} parent=1 // pred_check_branch
      %169 = sbr.rel (0) target = $region25
    $region24: #{tpu_custom_call.1} parent=1 // pred_region
      %s171 = ssub.s32 32, 32
      %172 = vsyncadd [#allocation9], %s171
      %s174 = sshll.u32 [#allocation8], 4
      %s175 = int_to_ptr.vmem [resolvable:$true] %s174
      %177 = dma.vmem_to_hbm [thread:$0]  %s175, 32, %s3, [#allocation9]
    $region25: #{tpu_custom_call.1} parent=1 // pred_fallthru
      _
    // Predicated region
    $region26: #{tpu_custom_call.1} parent=1 // pred_check
      _
    $region27: #{tpu_custom_call.1} parent=1 // pred_check_branch
      %179 = sbr.rel (0) target = $region29
    $region28: #{tpu_custom_call.1} parent=1 // pred_region
      %180 = dma.done [#allocation4], 256
    $region29: #{tpu_custom_call.1} parent=1 // pred_fallthru
      _
    // Predicated region
    $region30: #{tpu_custom_call.1} parent=1 // pred_check
      _
    $region31: #{tpu_custom_call.1} parent=1 // pred_check_branch
      %182 = sbr.rel (0) target = $region33
    $region32: #{tpu_custom_call.1} parent=1 // pred_region
      %183 = dma.done [#allocation9], 32
    $region33: #{tpu_custom_call.1} parent=1 // pred_fallthru
      _
    %184 = vsyncpa [#allocation3], 1
    %185 = vsyncpa [#allocation6], 1
    %186 = vsyncpa [#allocation4], 1
    %187 = vsyncpa [#allocation9], 1

</llo_original>
